<compile_context>
chip_gen: v7x
topology: tpu7x:2x2x1
jax: 0.10.0
libtpu: 0.0.40
codegen_flags: <defaults>
</compile_context>

<pallas_src>
import jax
import jax.numpy as jnp
from jax import lax
from jax.experimental import pallas as pl
from jax.experimental.pallas import tpu as pltpu

_HEADROOM_BYTES = 4 << 20  # compiler scratch / semaphores / misc


def _vmem_budget_bytes():
    """Usable VMEM budget (bytes), leaving headroom over the physical size."""
    try:
        cap = int(pltpu.get_tpu_info().vmem_capacity_bytes)
    except Exception:
        cap = 64 * 1024 * 1024  # conservative: v7x has 64 MiB per TensorCore
    return cap * 3 // 4


def _weights_bytes(w1, w2):
    return int(w1.size * w1.dtype.itemsize + w2.size * w2.dtype.itemsize)


def _fits_single_pass(block_bytes, weight_bytes, budget):
    # in block + out block (double-buffered each) + double-buffered weights.
    return 4 * block_bytes + 2 * weight_bytes + _HEADROOM_BYTES <= budget


def _pick_hw_tile(C, HW, itemsize, budget):
    """Lane-axis tile for the fallback: multiple of 128 (or the full HW)."""
    if HW <= 128:
        # TODO(synk): very large C with tiny HW would additionally need C
        # tiling of the fallback; not needed for typical SE shapes.
        return HW
    # ~8 MiB tiles amortize the ~0.35 us/step overhead on v7x; stay under the
    # budget with 4 live buffers (2x in + 2x out).
    target = min(8 << 20, max(1 << 20, (budget - _HEADROOM_BYTES) // 4))
    cand = (target // max(C * itemsize, 1)) // 128 * 128
    cand = max(128, min(cand, (HW // 128) * 128))
    return int(cand)


# ---------------------------------------------------------------------------
# Path A: single pass — one grid step per batch element, whole (C, HW) slab.
# Optimal HBM traffic (1x read + 1x write); used whenever the slab fits VMEM.
# ---------------------------------------------------------------------------
def _se_single_pass(x_flat, w1, w2, *, vmem_limit, donate_input=False):
    N, C, HW = x_flat.shape
    Cr = w1.shape[0]
    inv_hw = 1.0 / HW

    def kernel(x_ref, w1_ref, w2_ref, o_ref):
        x = x_ref[...]                                            # (C, HW), input dtype
        # squeeze: f32-accumulated spatial mean (no f32 copy of the tile)
        # TODO(synk): on v5e a jnp.dot(x, ones) MXU reduction may shave the
        # per-step VPU/XLU epilogue; verify with a bundle dump before using.
        mean = jnp.sum(x, axis=-1, keepdims=True,
                       dtype=jnp.float32) * inv_hw                # (C, 1) f32
        # excitation: fc1 -> relu -> fc2 -> sigmoid (weights fed in native dtype)
        z1 = jnp.dot(w1_ref[...], mean,
                     preferred_element_type=jnp.float32)          # (Cr, 1)
        z1 = jnp.maximum(z1, 0.0)
        z2 = jnp.dot(w2_ref[...], z1,
                     preferred_element_type=jnp.float32)          # (C, 1)
        scale = jax.nn.sigmoid(z2)
        # rescale in the input dtype (cast the tiny scale, not the tile)
        o_ref[...] = x * scale.astype(x.dtype)

    itemsize = x_flat.dtype.itemsize
    cost = pl.CostEstimate(
        flops=int(2 * N * C * HW + 4 * N * C * Cr),
        transcendentals=int(N * C),
        bytes_accessed=int(2 * N * C * HW * itemsize
                           + 2 * C * Cr * w1.dtype.itemsize),
    )

    return pl.pallas_call(
        kernel,
        out_shape=jax.ShapeDtypeStruct((N, C, HW), x_flat.dtype),
        grid_spec=pltpu.PrefetchScalarGridSpec(
            num_scalar_prefetch=0,
            grid=(N,),
            in_specs=[
                pl.BlockSpec((pl.Squeezed(), C, HW), lambda n: (n, 0, 0)),
                pl.BlockSpec((Cr, C), lambda n: (0, 0)),
                pl.BlockSpec((C, Cr), lambda n: (0, 0)),
            ],
            out_specs=pl.BlockSpec((pl.Squeezed(), C, HW), lambda n: (n, 0, 0)),
        ),
        compiler_params=pltpu.CompilerParams(
            dimension_semantics=("parallel",),
            vmem_limit_bytes=int(vmem_limit)),
        cost_estimate=cost,
        input_output_aliases=({0: 0} if donate_input else {}),
    )(x_flat, w1, w2)


# ---------------------------------------------------------------------------
# Path B: fused two-sweep fallback for large C*HW slabs (e.g. on v7x 64 MiB).
# One pallas_call, grid (N, 2, T):
#   p = 0 : HW-tiled f32 pooled-sum accumulation into VMEM scratch; at the
#           last tile, the tiny excitation matmuls run into a (C,1) scratch.
#   p = 1 : HW-tiled rescale of the re-streamed x tiles by the resident scale.
# HBM traffic: 2 reads + 1 write of x (vs 2R+1W+scale round-trip before).
# ---------------------------------------------------------------------------
def _se_fused_tiled(x_flat, w1, w2, *, hw_tile, vmem_limit, donate_input=False):
    N, C, HW = x_flat.shape
    Cr = w1.shape[0]
    T = pl.cdiv(HW, hw_tile)
    rem = HW - (T - 1) * hw_tile          # valid columns in the last tile
    needs_mask = rem != hw_tile           # static: emit mask only if needed
    inv_hw = 1.0 / HW
    itemsize = x_flat.dtype.itemsize

    def kernel(x_ref, w1_ref, w2_ref, o_ref, sum_ref, scale_ref):
        p = pl.program_id(1)              # 0 = pooling sweep, 1 = rescale sweep
        t = pl.program_id(2)
        x = x_ref[...]                    # (C, hw_tile), input dtype

        @pl.when(p == 0)
        def _pool_phase():
            @pl.when(t == 0)
            def _init():
                sum_ref[...] = jnp.zeros_like(sum_ref)

            if needs_mask:
                # only the (partial) last tile pays the iota/compare/select
                @pl.when(t == T - 1)
                def _partial_tile():
                    col = lax.broadcasted_iota(jnp.int32, x.shape, 1)
                    xm = jnp.where(col < rem, x, jnp.zeros_like(x))
                    sum_ref[...] += jnp.sum(xm, axis=-1, keepdims=True,
                                            dtype=jnp.float32)

                @pl.when(t < T - 1)
                def _full_tile():
                    sum_ref[...] += jnp.sum(x, axis=-1, keepdims=True,
                                            dtype=jnp.float32)
            else:
                sum_ref[...] += jnp.sum(x, axis=-1, keepdims=True,
                                        dtype=jnp.float32)

            @pl.when(t == T - 1)
            def _excite():
                mean = sum_ref[...] * inv_hw                          # (C, 1) f32
                z1 = jnp.dot(w1_ref[...], mean,
                             preferred_element_type=jnp.float32)      # (Cr, 1)
                z1 = jnp.maximum(z1, 0.0)
                z2 = jnp.dot(w2_ref[...], z1,
                             preferred_element_type=jnp.float32)      # (C, 1)
                scale_ref[...] = jax.nn.sigmoid(z2)

        @pl.when(p == 1)
        def _rescale_phase():
            o_ref[...] = x * scale_ref[...].astype(x.dtype)           # (C,1) bcast

    cost = pl.CostEstimate(
        flops=int(2 * N * C * HW + 4 * N * C * Cr),
        transcendentals=int(N * C),
        bytes_accessed=int(3 * N * C * HW * itemsize
                           + 2 * C * Cr * w1.dtype.itemsize),
    )

    return pl.pallas_call(
        kernel,
        out_shape=jax.ShapeDtypeStruct((N, C, HW), x_flat.dtype),
        grid_spec=pltpu.PrefetchScalarGridSpec(
            num_scalar_prefetch=0,
            grid=(N, 2, T),
            in_specs=[
                pl.BlockSpec((pl.Squeezed(), C, hw_tile),
                             lambda n, p, t: (n, 0, t)),
                pl.BlockSpec((Cr, C), lambda n, p, t: (0, 0)),
                pl.BlockSpec((C, Cr), lambda n, p, t: (0, 0)),
            ],
            # Pin the output block index to (n, 0, 0) during the pooling sweep
            # (p == 0) so no unwritten buffer is flushed to HBM; the rescale
            # sweep (p == 1) revisits/writes every tile before it is flushed.
            out_specs=pl.BlockSpec((pl.Squeezed(), C, hw_tile),
                                   lambda n, p, t: (n, 0, t * p)),
            scratch_shapes=[pltpu.VMEM((C, 1), jnp.float32),   # pooled f32 sum
                            pltpu.VMEM((C, 1), jnp.float32)],  # sigmoid scale
        ),
        compiler_params=pltpu.CompilerParams(
            dimension_semantics=("parallel", "arbitrary", "arbitrary"),
            vmem_limit_bytes=int(vmem_limit)),
        cost_estimate=cost,
        input_output_aliases=({0: 0} if donate_input else {}),
    )(x_flat, w1, w2)


def se_module(x, w1, w2, *, single_pass_max_bytes=None, hw_tile=None,
              donate_input=False):
    """SEModule forward.  x: (N, C, H, W) NCHW; w1: (C//r, C); w2: (C, C//r)."""
    N, C, H, W = x.shape
    HW = H * W
    x_flat = x.reshape(N, C, HW)

    budget = _vmem_budget_bytes()
    block_bytes = C * HW * x.dtype.itemsize
    if single_pass_max_bytes is not None:       # explicit override (tests)
        use_single = block_bytes <= single_pass_max_bytes
    else:
        use_single = _fits_single_pass(block_bytes, _weights_bytes(w1, w2),
                                       budget)

    # NOTE(v7x): with N == 1 the single-pass grid=(N,) cannot shard across the
    # two TensorCores, but one TC already saturates HBM for this DMA-bound op,
    # so the 1-read+1-write single pass still beats the 2-read fallback.
    if use_single:
        out_flat = _se_single_pass(x_flat, w1, w2, vmem_limit=budget,
                                   donate_input=donate_input)
    else:
        if hw_tile is None:
            hw_tile = _pick_hw_tile(C, HW, x.dtype.itemsize, budget)
        out_flat = _se_fused_tiled(x_flat, w1, w2, hw_tile=hw_tile,
                                   vmem_limit=budget,
                                   donate_input=donate_input)
    return out_flat.reshape(N, C, H, W)


def _reference(x, w1, w2):
    # pure-JAX reference with identical semantics
    s = jnp.mean(x, axis=(2, 3))                      # (N, C)
    z1 = jnp.maximum(s @ w1.T, 0.0)                   # (N, Cr)
    z2 = jax.nn.sigmoid(z1 @ w2.T)                    # (N, C)
    return x * z2[:, :, None, None]


if __name__ == "__main__":
    # SEModule(channels=4, reduction=2) on x of shape (2, 4, 16, 16)
    N, C, H, W = 2, 4, 16, 16
    reduction = 2
    Cr = C // reduction

    key = jax.random.PRNGKey(0)
    kx, k1, k2, kx2 = jax.random.split(key, 4)
    x = jax.random.normal(kx, (N, C, H, W), dtype=jnp.float32)
    # Conv2d(kernel_size=1, bias=False) weights, deterministic init
    w1 = jax.random.normal(k1, (Cr, C), dtype=jnp.float32) * 0.5
    w2 = jax.random.normal(k2, (C, Cr), dtype=jnp.float32) * 0.5

    ref = _reference(x, w1, w2)

    # Path A: single-pass (auto-selected for this small slab)
    out_a = se_module(x, w1, w2)
    jax.block_until_ready(out_a)
    assert jnp.allclose(out_a, ref, atol=1e-5, rtol=1e-5), "single-pass mismatch"

    # Path B: force the fused two-sweep fallback (HW divisible by the tile)
    out_b = se_module(x, w1, w2, single_pass_max_bytes=0, hw_tile=128)
    jax.block_until_ready(out_b)
    assert jnp.allclose(out_b, ref, atol=1e-5, rtol=1e-5), "fused fallback mismatch"

    # Path B with a partial last tile (HW = 144, not a multiple of 128) to
    # exercise the masked pooling + masked partial-tile writeback.
    x2 = jax.random.normal(kx2, (N, C, 12, 12), dtype=jnp.float32)
    ref2 = _reference(x2, w1, w2)
    out_c = se_module(x2, w1, w2, single_pass_max_bytes=0, hw_tile=128)
    jax.block_until_ready(out_c)
    assert jnp.allclose(out_c, ref2, atol=1e-5, rtol=1e-5), "partial-tile mismatch"

    print("KERNEL_OK")
</pallas_src>

<mosaic_0001>
module attributes {stable_mosaic.version = 11 : i64} {
  func.func @kernel(%arg0: i32, %arg1: memref<1x4x256xf32, #tpu.memory_space<vmem>>, %arg2: memref<2x4xf32, #tpu.memory_space<vmem>>, %arg3: memref<4x2xf32, #tpu.memory_space<vmem>>, %arg4: memref<1x4x256xf32, #tpu.memory_space<vmem>>) attributes {dimension_semantics = [#tpu.dimension_semantics<parallel>], iteration_bounds = array<i64: 2>, scalar_prefetch = 0 : i64, scratch_operands = 0 : i64, tpu.core_type = #tpu.core_type<tc>, window_params = [{transform_indices = @transform_0, window_bounds = array<i64: 1, 4, 256>}, {pipeline_mode = #tpu.pipeline_mode<synchronous>, transform_indices = @transform_1, window_bounds = array<i64: 2, 4>}, {pipeline_mode = #tpu.pipeline_mode<synchronous>, transform_indices = @transform_2, window_bounds = array<i64: 4, 2>}, {transform_indices = @transform_3, window_bounds = array<i64: 1, 4, 256>}]} {
    %c0 = arith.constant 0 : index
    %c0_0 = arith.constant 0 : index
    %c0_1 = arith.constant 0 : index
    %0 = vector.load %arg1[%c0, %c0_0, %c0_1] : memref<1x4x256xf32, #tpu.memory_space<vmem>>, vector<1x4x256xf32>
    %1 = vector.shape_cast %0 : vector<1x4x256xf32> to vector<4x256xf32>
    %cst = arith.constant dense<0.000000e+00> : vector<4xf32>
    %2 = vector.multi_reduction <add>, %1, %cst [1] : vector<4x256xf32> to vector<4xf32>
    %3 = vector.shape_cast %2 : vector<4xf32> to vector<4x1xf32>
    %cst_2 = arith.constant 3.906250e-03 : f32
    %4 = vector.broadcast %cst_2 : f32 to vector<4x1xf32>
    %5 = arith.mulf %3, %4 : vector<4x1xf32>
    %c0_3 = arith.constant 0 : index
    %c0_4 = arith.constant 0 : index
    %6 = vector.load %arg2[%c0_3, %c0_4] : memref<2x4xf32, #tpu.memory_space<vmem>>, vector<2x4xf32>
    %cst_5 = arith.constant dense<0.000000e+00> : vector<2x1xf32>
    %7 = tpu.matmul %6, %5, %cst_5 {dimension_numbers = #tpu.dot_dimension_numbers<[1], [0], [0], [1], [0, 0, 1, 1], [], []>} : vector<2x4xf32>, vector<4x1xf32>, vector<2x1xf32> -> vector<2x1xf32>
    %cst_6 = arith.constant 0.000000e+00 : f32
    %8 = vector.broadcast %cst_6 : f32 to vector<2x1xf32>
    %9 = arith.maximumf %7, %8 : vector<2x1xf32>
    %c0_7 = arith.constant 0 : index
    %c0_8 = arith.constant 0 : index
    %10 = vector.load %arg3[%c0_7, %c0_8] : memref<4x2xf32, #tpu.memory_space<vmem>>, vector<4x2xf32>
    %cst_9 = arith.constant dense<0.000000e+00> : vector<4x1xf32>
    %11 = tpu.matmul %10, %9, %cst_9 {dimension_numbers = #tpu.dot_dimension_numbers<[1], [0], [0], [1], [0, 0, 1, 1], [], []>} : vector<4x2xf32>, vector<2x1xf32>, vector<4x1xf32> -> vector<4x1xf32>
    %12 = arith.negf %11 : vector<4x1xf32>
    %13 = math.exp %12 : vector<4x1xf32>
    %cst_10 = arith.constant 1.000000e+00 : f32
    %14 = vector.broadcast %cst_10 : f32 to vector<4x1xf32>
    %15 = arith.addf %14, %13 : vector<4x1xf32>
    %16 = arith.divf %14, %15 : vector<4x1xf32>
    %17 = vector.broadcast %16 : vector<4x1xf32> to vector<4x256xf32>
    %18 = arith.mulf %1, %17 : vector<4x256xf32>
    %c0_11 = arith.constant 0 : index
    %c0_12 = arith.constant 0 : index
    %c0_13 = arith.constant 0 : index
    %19 = vector.load %arg4[%c0_11, %c0_12, %c0_13] : memref<1x4x256xf32, #tpu.memory_space<vmem>>, vector<1x4x256xf32>
    %20 = vector.shape_cast %19 : vector<1x4x256xf32> to vector<4x256xf32>
    %21 = vector.shape_cast %18 : vector<4x256xf32> to vector<1x4x256xf32>
    tpu.vector_store %arg4[%c0_11, %c0_12, %c0_13], %21 {strides = array<i32>} : memref<1x4x256xf32, #tpu.memory_space<vmem>>, vector<1x4x256xf32>,
    return
  }
  func.func @transform_0(%arg0: i32) -> (i32, i32, i32) {
    %c0_i32 = arith.constant 0 : i32
    %c0_i32_0 = arith.constant 0 : i32
    %c0_i32_1 = arith.constant 0 : i32
    return %arg0, %c0_i32, %c0_i32_0 : i32, i32, i32
  }
  func.func @transform_1(%arg0: i32) -> (i32, i32) {
    %c0_i32 = arith.constant 0 : i32
    %c0_i32_0 = arith.constant 0 : i32
    %c0_i32_1 = arith.constant 0 : i32
    return %c0_i32, %c0_i32_0 : i32, i32
  }
  func.func @transform_2(%arg0: i32) -> (i32, i32) {
    %c0_i32 = arith.constant 0 : i32
    %c0_i32_0 = arith.constant 0 : i32
    %c0_i32_1 = arith.constant 0 : i32
    return %c0_i32, %c0_i32_0 : i32, i32
  }
  func.func @transform_3(%arg0: i32) -> (i32, i32, i32) {
    %c0_i32 = arith.constant 0 : i32
    %c0_i32_0 = arith.constant 0 : i32
    %c0_i32_1 = arith.constant 0 : i32
    return %arg0, %c0_i32, %c0_i32_0 : i32, i32, i32
  }
}

</mosaic_0001>

<llo_original>
// kernel: tpu_custom_call.1
$region0: #{tpu_custom_call.1}
  #allocation0 [shape = 'u32[]', space=smem, size = 0x4, offset = 0x4, fixed_abs, tag = 'smem constant byte address 0x4 - core index']
  #allocation1 [shape = 'u32[144,128]{1,0:T(1,128)}', space=vmem, size = 0x12000, scoped, tag = 'internal scratch']
  %s0 = inlined_call_operand.hbm [shape: f32[2,4,256], index: 0, kind: input, shape index: {}]
  %s1 = inlined_call_operand.vmem [shape: f32[2,4], index: 1, kind: input, shape index: {}]
  %s2 = inlined_call_operand.vmem [shape: f32[4,2], index: 2, kind: input, shape index: {}]
  %s3 = inlined_call_operand.hbm [shape: f32[2,4,256], index: 3, kind: output, shape index: {}]
  %s4 = sld [smem:[#allocation0]]
  $region49: #{tpu_custom_call.1} parent=0
    _
  %s6 = ssub.s32 1, %s4
  %s7 = scalar_select 0, %s6, %s4
  $region1: #{tpu_custom_call.1} parent=0
    #allocation2 [shape = 'u8[8192]{0}', space=vmem, size = 0x2000, scoped, tag = 'input window, operand 0']
    #allocation3 [shape = 's32[2]{0}', space=sflag, size = 0x8, scoped, tag = 'scoped memory for tpu_custom_call.1']
    #allocation4 [shape = 's32[2]{0}', space=sflag, size = 0x8, scoped, tag = 'scoped memory for tpu_custom_call.1']
    #allocation5 [shape = 'u8[8192]{0}', space=vmem, size = 0x2000, scoped, tag = 'output window, operand 0']
    %8 = vsyncpa [#allocation3], 0
    %s9 = scalar_lea.sflag [#allocation3], 1
    %10 = vsyncpa %s9, 0
    %11 = vsyncpa [#allocation4], 0
    %s12 = scalar_lea.sflag [#allocation4], 1
    %13 = vsyncpa %s12, 0
    loop: start=0, step=1, limit=4
    $region2: #{tpu_custom_call.1} parent=1 // loop_pre_header
      _
    $region3: #{tpu_custom_call.1} parent=1 // loop_header
      %s15 = sphi 0, %s19
      %p16 = scmp.ge.s32.totalorder %s15, 4
      %s25 = sphi 0, %s27
      %s28 = sphi 0, %s25
      %s29 = sphi 0, %s28
      %s45 = sphi 0, %s29
      %s49 = sphi 0, %s49
      %s51 = sphi 0, %s49
      %s52 = sphi 0, %s51
      %s66 = sphi 0, %s52
      %s70 = sphi 0, %s70
      %s72 = sphi 0, %s70
      %s73 = sphi 0, %s72
      %s87 = sphi 0, %s73
      %s93 = sphi 0, %s95
      %s96 = sphi 0, %s93
      %s97 = sphi 0, %s96
      %s113 = sphi 0, %s97
    $region4: #{tpu_custom_call.1} parent=1 // loop_header_branch
      %18 = sbr.rel (%p16) target = $region8
    $region5: #{tpu_custom_call.1} parent=1 // loop_body
      %s20 = ssub.s32 %s15, 1
      %s21 = ssub.s32 %s15, 2
      %s22 = sadd.s32 %s15, 1
      %s23 = ssub.s32 %s15, %s22
      %p24 = scmp.eq.s32.totalorder %s23, 0
      %s26 = sadd.s32 %s25, 1
      %s27 = scalar_select %p24, %s25, %s26
      %p30 = pneg %p24
      %p31 = scmp.eq.s32.totalorder %s15, 1
      %p32 = por %p30, %p31
      %p33 = scmp.ne.s32.totalorder %s25, %s28
      %p34 = scmp.eq.s32.totalorder %s15, 0
      %p35 = por %p33, %p34
      %p36 = scmp.ne.s32.totalorder %s25, %s28
      %p37 = scmp.eq.s32.totalorder %s20, 1
      %p38 = por %p36, %p37
      %p39 = scmp.ne.s32.totalorder %s28, %s29
      %p40 = scmp.eq.s32.totalorder %s20, 0
      %p41 = por %p39, %p40
      %p42 = scmp.ne.s32.totalorder %s28, %s29
      %p43 = scmp.eq.s32.totalorder %s21, 1
      %p44 = por %p42, %p43
      %p46 = scmp.ne.s32.totalorder %s29, %s45
      %p47 = scmp.eq.s32.totalorder %s21, 0
      %p48 = por %p46, %p47
      %s50 = sadd.s32 %s49, 1
      %p53 = scmp.eq.s32.totalorder %s15, 1
      %p54 = scmp.ne.s32.totalorder %s49, %s51
      %p55 = scmp.eq.s32.totalorder %s15, 0
      %p56 = por %p54, %p55
      %p57 = scmp.ne.s32.totalorder %s49, %s51
      %p58 = scmp.eq.s32.totalorder %s20, 1
      %p59 = por %p57, %p58
      %p60 = scmp.ne.s32.totalorder %s51, %s52
      %p61 = scmp.eq.s32.totalorder %s20, 0
      %p62 = por %p60, %p61
      %p63 = scmp.ne.s32.totalorder %s51, %s52
      %p64 = scmp.eq.s32.totalorder %s21, 1
      %p65 = por %p63, %p64
      %p67 = scmp.ne.s32.totalorder %s52, %s66
      %p68 = scmp.eq.s32.totalorder %s21, 0
      %p69 = por %p67, %p68
      %s71 = sadd.s32 %s70, 1
      %p74 = scmp.eq.s32.totalorder %s15, 1
      %p75 = scmp.ne.s32.totalorder %s70, %s72
      %p76 = scmp.eq.s32.totalorder %s15, 0
      %p77 = por %p75, %p76
      %p78 = scmp.ne.s32.totalorder %s70, %s72
      %p79 = scmp.eq.s32.totalorder %s20, 1
      %p80 = por %p78, %p79
      %p81 = scmp.ne.s32.totalorder %s72, %s73
      %p82 = scmp.eq.s32.totalorder %s20, 0
      %p83 = por %p81, %p82
      %p84 = scmp.ne.s32.totalorder %s72, %s73
      %p85 = scmp.eq.s32.totalorder %s21, 1
      %p86 = por %p84, %p85
      %p88 = scmp.ne.s32.totalorder %s73, %s87
      %p89 = scmp.eq.s32.totalorder %s21, 0
      %p90 = por %p88, %p89
      %s91 = ssub.s32 %s15, %s22
      %p92 = scmp.eq.s32.totalorder %s91, 0
      %s94 = sadd.s32 %s93, 1
      %s95 = scalar_select %p92, %s93, %s94
      %p98 = pneg %p92
      %p99 = scmp.eq.s32.totalorder %s15, 1
      %p100 = por %p98, %p99
      %p101 = scmp.ne.s32.totalorder %s93, %s96
      %p102 = scmp.eq.s32.totalorder %s15, 0
      %p103 = por %p101, %p102
      %p104 = scmp.ne.s32.totalorder %s93, %s96
      %p105 = scmp.eq.s32.totalorder %s20, 1
      %p106 = por %p104, %p105
      %p107 = scmp.ne.s32.totalorder %s96, %s97
      %p108 = scmp.eq.s32.totalorder %s20, 0
      %p109 = por %p107, %p108
      %p110 = scmp.ne.s32.totalorder %s96, %s97
      %p111 = scmp.eq.s32.totalorder %s21, 1
      %p112 = por %p110, %p111
      %p114 = scmp.ne.s32.totalorder %s97, %s113
      %p115 = scmp.eq.s32.totalorder %s21, 0
      %p116 = por %p114, %p115
      %p117 = scmp.le.s32.totalorder 1, %s15
      %p118 = scmp.lt.s32.totalorder %s15, 3
      %p119 = pnand %p117, %p118
      %p120 = pneg %p119
      // Predicated region
      $region9: #{tpu_custom_call.1} parent=5 // pred_check
        _
      $region10: #{tpu_custom_call.1} parent=5 // pred_check_branch
        %122 = sbr.rel (%p119) target = $region12
      $region11: #{tpu_custom_call.1} parent=5 // pred_region
        %s123 = ssub.s32 %s15, 1
        // Predicated region
        $region13: #{tpu_custom_call.1} parent=11 // pred_check
          %p124 = pneg %p62
        $region14: #{tpu_custom_call.1} parent=11 // pred_check_branch
          %126 = sbr.rel (%p124) target = $region16
        $region15: #{tpu_custom_call.1} parent=11 // pred_region
          _
        $region16: #{tpu_custom_call.1} parent=11 // pred_fallthru
          _
        // Predicated region
        $region17: #{tpu_custom_call.1} parent=11 // pred_check
          %p127 = pneg %p83
        $region18: #{tpu_custom_call.1} parent=11 // pred_check_branch
          %129 = sbr.rel (%p127) target = $region20
        $region19: #{tpu_custom_call.1} parent=11 // pred_region
          _
        $region20: #{tpu_custom_call.1} parent=11 // pred_fallthru
          _
      $region12: #{tpu_custom_call.1} parent=5 // pred_fallthru
        _
      %p130 = scmp.lt.s32.totalorder %s15, 2
      // Predicated region
      $region21: #{tpu_custom_call.1} parent=5 // pred_check
        %p131 = pneg %p130
      $region22: #{tpu_custom_call.1} parent=5 // pred_check_branch
        %133 = sbr.rel (%p131) target = $region24
      $region23: #{tpu_custom_call.1} parent=5 // pred_region
        // Predicated region
        $region25: #{tpu_custom_call.1} parent=23 // pred_check
          %p134 = pneg %p35
        $region26: #{tpu_custom_call.1} parent=23 // pred_check_branch
          %136 = sbr.rel (%p134) target = $region28
        $region27: #{tpu_custom_call.1} parent=23 // pred_region
          %s137 = sand.u32 %s25, 1
          %s138 = scalar_lea.sflag [#allocation3], %s137
          %s139 = sand.u32 %s25, 1
          %s140 = smul.addr %s139, 8
          %s141 = scalar_lea.vmem [#allocation2], %s140
          %s143 = ssub.s32 128, 128
          %144 = vsyncadd %s138, %s143
          %s145 = smul.addr %s15, 2
          %s146 = smul.addr %s145, 64
          %s147 = scalar_lea.hbm %s0, %s146
          %s149 = sshll.u32 %s141, 4
          %s150 = int_to_ptr.vmem [resolvable:$true] %s149
          %152 = dma.hbm_to_vmem [thread:$0]  %s147, 128, %s150, %s138
        $region28: #{tpu_custom_call.1} parent=23 // pred_fallthru
          _
      $region24: #{tpu_custom_call.1} parent=5 // pred_fallthru
        _
      %p153 = scmp.le.s32.totalorder 1, %s15
      %p154 = scmp.lt.s32.totalorder %s15, 3
      %p155 = pnand %p153, %p154
      %p156 = pneg %p155
      // Predicated region
      $region29: #{tpu_custom_call.1} parent=5 // pred_check
        _
      $region30: #{tpu_custom_call.1} parent=5 // pred_check_branch
        %158 = sbr.rel (%p155) target = $region32
      $region31: #{tpu_custom_call.1} parent=5 // pred_region
        %s159 = ssub.s32 %s15, 1
        %s160 = sand.u32 %s28, 1
        %s161 = scalar_lea.sflag [#allocation3], %s160
        %s162 = sand.u32 %s28, 1
        %s163 = smul.addr %s162, 8
        %s164 = scalar_lea.vmem [#allocation2], %s163
        // Predicated region
        $region33: #{tpu_custom_call.1} parent=31 // pred_check
          %p165 = pneg %p41
        $region34: #{tpu_custom_call.1} parent=31 // pred_check_branch
          %167 = sbr.rel (%p165) target = $region36
        $region35: #{tpu_custom_call.1} parent=31 // pred_region
          %168 = dma.done %s161, 128
        $region36: #{tpu_custom_call.1} parent=31 // pred_fallthru
          _
        %s169 = sand.u32 %s28, 1
        %s170 = scalar_lea.sflag [#allocation3], %s169
        %s171 = sand.u32 %s28, 1
        %s172 = smul.addr %s171, 8
        %s173 = scalar_lea.vmem [#allocation2], %s172
        %p174 = pneg %p41
        %p175 = pneg %p38
        %p176 = pneg %p62
        %p177 = pneg %p59
        %p178 = pneg %p83
        %p179 = pneg %p80
        %p180 = pneg %p109
        %p181 = pneg %p106
        %s182 = sand.u32 %s96, 1
        %s183 = scalar_lea.sflag [#allocation4], %s182
        %s184 = sand.u32 %s96, 1
        %s185 = smul.addr %s184, 8
        %s186 = scalar_lea.vmem [#allocation5], %s185
        %v187 = vld [vmem:[%s164] sm:$0xff]
        %v189 = vcombine.high %v187, %v187
        %vm191 = vcmask 1043456
        %v192 = vsel %vm191, %v187, 0.0
        %v193 = vsel %vm191, %v189, 0.0
        %v194 = vadd.f32 %v192, %v193
        %195 = vadd.xlane.f32.xlu0 %v194
        %v196 = vpop.xlane.xlu0 %195
        %v197 = vmul.f32 %v196, 0.00390625
        %v198 = vld [vmem:[%s1] sm:$0x3]
        %vm199 = vcmask 31744
        %v201 = vsel %vm199, %v198, 0
        %v204 = vsel %vm191, %v197, 0
        %206 = vmatprep.subr.mxu0 0.0
        %207 = vmatpush1.msra.mxu0 %v204
        %208 = vmatprep.subr.mxu0 0.0
        %209 = vmatpush1.msra.mxu0 0.0
        %210 = vmatprep.subr.mxu0 0.0
        %211 = vmatpush1.msra.mxu0 0.0
        %212 = vmatprep.subr.mxu0 0.0
        %213 = vmatpush1.msra.mxu0 0.0
        %214 = vmatprep.subr.mxu0 0.0
        %215 = vmatpush1.msra.mxu0 0.0
        %216 = vmatprep.subr.mxu0 0.0
        %217 = vmatpush1.msra.mxu0 0.0
        %218 = vmatprep.subr.mxu0 0.0
        %219 = vmatpush1.msra.mxu0 0.0
        %220 = vmatprep.subr.mxu0 0.0
        %221 = vmatpush1.msra.mxu0 0.0
        %222 = vmatprep.subr.mxu0 0.0
        %223 = vmatpush1.msra.mxu0 0.0
        %224 = vmatprep.subr.mxu0 0.0
        %225 = vmatpush1.msra.mxu0 0.0
        %226 = vmatprep.subr.mxu0 0.0
        %227 = vmatpush1.msra.mxu0 0.0
        %228 = vmatprep.subr.mxu0 0.0
        %229 = vmatpush1.msra.mxu0 0.0
        %230 = vmatprep.subr.mxu0 0.0
        %231 = vmatpush1.msra.mxu0 0.0
        %232 = vmatprep.subr.mxu0 0.0
        %233 = vmatpush1.msra.mxu0 0.0
        %234 = vmatprep.subr.mxu0 0.0
        %235 = vmatpush1.msra.mxu0 0.0
        %236 = vmatprep.subr.mxu0 0.0
        %237 = vmatpush1.msra.mxu0 0.0
        %238 = vmatprep.subr.mxu0 0.0
        %239 = vmatpush1.msra.mxu0 0.0
        %240 = vmatprep.subr.mxu0 0.0
        %241 = vmatpush1.msra.mxu0 0.0
        %242 = vmatprep.subr.mxu0 0.0
        %243 = vmatpush1.msra.mxu0 0.0
        %244 = vmatprep.subr.mxu0 0.0
        %245 = vmatpush1.msra.mxu0 0.0
        %246 = vmatprep.subr.mxu0 0.0
        %247 = vmatpush1.msra.mxu0 0.0
        %248 = vmatprep.subr.mxu0 0.0
        %249 = vmatpush1.msra.mxu0 0.0
        %250 = vmatprep.subr.mxu0 0.0
        %251 = vmatpush1.msra.mxu0 0.0
        %252 = vmatprep.subr.mxu0 0.0
        %253 = vmatpush1.msra.mxu0 0.0
        %254 = vmatprep.subr.mxu0 0.0
        %255 = vmatpush1.msra.mxu0 0.0
        %256 = vmatprep.subr.mxu0 0.0
        %257 = vmatpush1.msra.mxu0 0.0
        %258 = vmatprep.subr.mxu0 0.0
        %259 = vmatpush1.msra.mxu0 0.0
        %260 = vmatprep.subr.mxu0 0.0
        %261 = vmatpush1.msra.mxu0 0.0
        %262 = vmatprep.subr.mxu0 0.0
        %263 = vmatpush1.msra.mxu0 0.0
        %264 = vmatprep.subr.mxu0 0.0
        %265 = vmatpush1.msra.mxu0 0.0
        %266 = vmatprep.subr.mxu0 0.0
        %267 = vmatpush1.msra.mxu0 0.0
        %268 = vmatprep.subr.mxu0 0.0
        %269 = vmatpush1.msra.mxu0 0.0
        %270 = vmatprep.mubr.f32.mxu0 0.0
        %271 = vmatmul.mubr.f32.gmra.mrb[0].mxu0 %v201
        %v272 = vpop.f32.mrb[0].mxu0
        %v273 = vadd.f32 0.0, %v272
        %v274 = vpop.f32.mrb[0].mxu0
        %275 = vdwg.mxu0
        %v276 = vmax.f32 %v273, 0.0
        %v277 = vld [vmem:[%s2] sm:$0xf]
        %vm278 = vcmask 15360
        %v280 = vsel %vm278, %v277, 0
        %vm282 = vcmask 1041408
        %v284 = vsel %vm282, %v276, 0
        %286 = vmatprep.subr.mxu0 0.0
        %287 = vmatpush1.msra.mxu0 %v284
        %288 = vmatprep.subr.mxu0 0.0
        %289 = vmatpush1.msra.mxu0 0.0
        %290 = vmatprep.subr.mxu0 0.0
        %291 = vmatpush1.msra.mxu0 0.0
        %292 = vmatprep.subr.mxu0 0.0
        %293 = vmatpush1.msra.mxu0 0.0
        %294 = vmatprep.subr.mxu0 0.0
        %295 = vmatpush1.msra.mxu0 0.0
        %296 = vmatprep.subr.mxu0 0.0
        %297 = vmatpush1.msra.mxu0 0.0
        %298 = vmatprep.subr.mxu0 0.0
        %299 = vmatpush1.msra.mxu0 0.0
        %300 = vmatprep.subr.mxu0 0.0
        %301 = vmatpush1.msra.mxu0 0.0
        %302 = vmatprep.subr.mxu0 0.0
        %303 = vmatpush1.msra.mxu0 0.0
        %304 = vmatprep.subr.mxu0 0.0
        %305 = vmatpush1.msra.mxu0 0.0
        %306 = vmatprep.subr.mxu0 0.0
        %307 = vmatpush1.msra.mxu0 0.0
        %308 = vmatprep.subr.mxu0 0.0
        %309 = vmatpush1.msra.mxu0 0.0
        %310 = vmatprep.subr.mxu0 0.0
        %311 = vmatpush1.msra.mxu0 0.0
        %312 = vmatprep.subr.mxu0 0.0
        %313 = vmatpush1.msra.mxu0 0.0
        %314 = vmatprep.subr.mxu0 0.0
        %315 = vmatpush1.msra.mxu0 0.0
        %316 = vmatprep.subr.mxu0 0.0
        %317 = vmatpush1.msra.mxu0 0.0
        %318 = vmatprep.subr.mxu0 0.0
        %319 = vmatpush1.msra.mxu0 0.0
        %320 = vmatprep.subr.mxu0 0.0
        %321 = vmatpush1.msra.mxu0 0.0
        %322 = vmatprep.subr.mxu0 0.0
        %323 = vmatpush1.msra.mxu0 0.0
        %324 = vmatprep.subr.mxu0 0.0
        %325 = vmatpush1.msra.mxu0 0.0
        %326 = vmatprep.subr.mxu0 0.0
        %327 = vmatpush1.msra.mxu0 0.0
        %328 = vmatprep.subr.mxu0 0.0
        %329 = vmatpush1.msra.mxu0 0.0
        %330 = vmatprep.subr.mxu0 0.0
        %331 = vmatpush1.msra.mxu0 0.0
        %332 = vmatprep.subr.mxu0 0.0
        %333 = vmatpush1.msra.mxu0 0.0
        %334 = vmatprep.subr.mxu0 0.0
        %335 = vmatpush1.msra.mxu0 0.0
        %336 = vmatprep.subr.mxu0 0.0
        %337 = vmatpush1.msra.mxu0 0.0
        %338 = vmatprep.subr.mxu0 0.0
        %339 = vmatpush1.msra.mxu0 0.0
        %340 = vmatprep.subr.mxu0 0.0
        %341 = vmatpush1.msra.mxu0 0.0
        %342 = vmatprep.subr.mxu0 0.0
        %343 = vmatpush1.msra.mxu0 0.0
        %344 = vmatprep.subr.mxu0 0.0
        %345 = vmatpush1.msra.mxu0 0.0
        %346 = vmatprep.subr.mxu0 0.0
        %347 = vmatpush1.msra.mxu0 0.0
        %348 = vmatprep.subr.mxu0 0.0
        %349 = vmatpush1.msra.mxu0 0.0
        %350 = vmatprep.mubr.f32.mxu0 0.0
        %351 = vmatmul.mubr.f32.gmra.mrb[0].mxu0 %v280
        %v352 = vpop.f32.mrb[0].mxu0
        %v353 = vadd.f32 0.0, %v352
        %v354 = vpop.f32.mrb[0].mxu0
        %355 = vdwg.mxu0
        %v356 = vxor.u32 %v353, 2147483648
        %v357 = vmul.f32 %v356, 1.442695
        %v358 = vpow.pop %v357
        %v359 = vadd.f32 %v358, 1.0
        %v360 = vrcp.pop %v359
        %v361 = vmul.f32 1.0, %v360
        %363 = vset.pattern.permute.xlu0 0
        %364 = vperm.xlu0 %363, %v361
        %v365 = vpop.permute.xlu0 %364
        %v367 = vunpack.c.l.s4 839922192
        %v368 = vunpack.c.0.s8 %v367
        %v369 = vlaneseq
        %v370 = vshrl.u32 %v369, 7
        %v371 = vsub.s32 %v368, %v370
        %v372 = vrot.slane %v365, %v371
        %v374 = vmul.f32 %v187, %v372
        %375 = vst [vmem:[%s186] sm:$0xff] %v374
        %s376 = sand.u32 %s96, 1
        %s377 = scalar_lea.sflag [#allocation4], %s376
        %s378 = sand.u32 %s96, 1
        %s379 = smul.addr %s378, 8
        %s380 = scalar_lea.vmem [#allocation5], %s379
        // Predicated region
        $region37: #{tpu_custom_call.1} parent=31 // pred_check
          %p381 = pneg %p106
        $region38: #{tpu_custom_call.1} parent=31 // pred_check_branch
          %383 = sbr.rel (%p381) target = $region40
        $region39: #{tpu_custom_call.1} parent=31 // pred_region
          %s385 = ssub.s32 128, 128
          %386 = vsyncadd %s377, %s385
          %s387 = smul.addr %s20, 2
          %s388 = smul.addr %s387, 64
          %s389 = scalar_lea.hbm %s3, %s388
          %s391 = sshll.u32 %s380, 4
          %s392 = int_to_ptr.vmem [resolvable:$true] %s391
          %394 = dma.vmem_to_hbm [thread:$0]  %s392, 128, %s389, %s377
        $region40: #{tpu_custom_call.1} parent=31 // pred_fallthru
          _
      $region32: #{tpu_custom_call.1} parent=5 // pred_fallthru
        _
      %p395 = scmp.le.s32.totalorder 2, %s15
      // Predicated region
      $region41: #{tpu_custom_call.1} parent=5 // pred_check
        %p396 = pneg %p395
      $region42: #{tpu_custom_call.1} parent=5 // pred_check_branch
        %398 = sbr.rel (%p396) target = $region44
      $region43: #{tpu_custom_call.1} parent=5 // pred_region
        %s399 = ssub.s32 %s15, 2
        // Predicated region
        $region45: #{tpu_custom_call.1} parent=43 // pred_check
          %p400 = pneg %p112
        $region46: #{tpu_custom_call.1} parent=43 // pred_check_branch
          %402 = sbr.rel (%p400) target = $region48
        $region47: #{tpu_custom_call.1} parent=43 // pred_region
          %s403 = sand.u32 %s97, 1
          %s404 = scalar_lea.sflag [#allocation4], %s403
          %s405 = sand.u32 %s97, 1
          %s406 = smul.addr %s405, 8
          %s407 = scalar_lea.vmem [#allocation5], %s406
          %408 = dma.done %s404, 128
        $region48: #{tpu_custom_call.1} parent=43 // pred_fallthru
          _
      $region44: #{tpu_custom_call.1} parent=5 // pred_fallthru
        _
    $region6: #{tpu_custom_call.1} parent=1 // loop_footer
      %s19 = sadd.s32 1, %s15
    $region7: #{tpu_custom_call.1} parent=1 // loop_footer_branch
      %14 = sbr.rel target = $region3
    $region8: #{tpu_custom_call.1} parent=1 // loop_exit
      _
    %409 = vsyncpa [#allocation3], 1
    %s410 = scalar_lea.sflag [#allocation3], 1
    %411 = vsyncpa %s410, 1
    %412 = vsyncpa [#allocation4], 1
    %s413 = scalar_lea.sflag [#allocation4], 1
    %414 = vsyncpa %s413, 1

</llo_original>
